<compile_context>
chip_gen: v6e
topology: v6e:2x2x1
jax: 0.10.0
libtpu: 0.0.40
codegen_flags: <defaults>
</compile_context>

<pallas_src>
import math

import jax
import jax.numpy as jnp
from jax.experimental import pallas as pl
from jax.experimental.pallas import tpu as pltpu


def _round_up(x: int, m: int) -> int:
    return ((x + m - 1) // m) * m


def _vmem_capacity_bytes() -> int:
    """Physical VMEM per TensorCore; fall back to a v7x-safe 64 MiB."""
    try:
        return int(pltpu.get_tpu_info().vmem_capacity_bytes)
    except Exception:
        return 64 << 20


def _usable_vmem_bytes() -> int:
    # Leave ~25% headroom for compiler-internal scratch and pipeline buffers.
    return (_vmem_capacity_bytes() * 3) // 4


# ---------------------------------------------------------------------------
# Fast path: table resident in VMEM (loaded once), batched row gather.
# ---------------------------------------------------------------------------
def _token_embedding_vmem_resident(ids: jax.Array, emb_table: jax.Array,
                                   *, block_tokens: int) -> jax.Array:
    vocab_size, emb_size = emb_table.shape
    out_dtype = emb_table.dtype
    itemsize = emb_table.dtype.itemsize
    scale = float(math.sqrt(emb_size))          # plain Python float (not captured)
    n_tokens = ids.shape[0]

    # Tokens per grid step: multiple of 8 so output tiles are sublane dense.
    t_blk = min(block_tokens, _round_up(n_tokens, 8))
    t_blk = max(8, _round_up(t_blk, 8))
    n_pad = _round_up(n_tokens, t_blk)
    if n_pad != n_tokens:
        ids = jnp.pad(ids, (0, n_pad - n_tokens))   # pad with id 0 (valid row)
    n_blocks = n_pad // t_blk
    n_groups = t_blk // 8

    def kernel(ids_ref, tbl_hbm, out_ref, tbl_vmem, load_sem):
        # Load the table HBM -> VMEM exactly once (single-buffered residency).
        # The grid axis is "arbitrary", so iterations run sequentially on one
        # TensorCore and the scratch table persists across all grid steps.
        @pl.when(pl.program_id(0) == 0)
        def _():
            cp = pltpu.make_async_copy(tbl_hbm, tbl_vmem, load_sem)
            cp.start()
            cp.wait()

        base = pl.program_id(0) * t_blk

        def group_body(g, carry):
            g_base = base + g * 8
            # Inner 8-row group is unrolled; gather 8 rows, pack them into a
            # dense (8, emb) block, scale once, single unmasked store.
            rows = [tbl_vmem[pl.ds(ids_ref[g_base + r], 1), :] for r in range(8)]
            block = jnp.concatenate(rows, axis=0)
            off = pl.multiple_of(g * 8, 8)
            out_ref[pl.ds(off, 8), :] = (
                block.astype(jnp.float32) * scale).astype(out_ref.dtype)
            return carry

        jax.lax.fori_loop(0, n_groups, group_body, 0)   # outer loop stays rolled

    table_bytes = vocab_size * emb_size * itemsize
    out_tile_bytes = t_blk * emb_size * itemsize
    # Single-buffered table + double-buffered output tiles + headroom.
    vmem_limit = int(min(_usable_vmem_bytes(),
                         table_bytes + 2 * out_tile_bytes + (6 << 20)))

    out_flat = pl.pallas_call(
        kernel,
        out_shape=jax.ShapeDtypeStruct((n_pad, emb_size), out_dtype),
        grid_spec=pltpu.PrefetchScalarGridSpec(
            num_scalar_prefetch=1,                       # ids -> SMEM
            grid=(n_blocks,),
            in_specs=[pl.BlockSpec(memory_space=pl.ANY)],  # table stays in HBM
            out_specs=pl.BlockSpec((t_blk, emb_size), lambda i, ids_ref: (i, 0)),
            scratch_shapes=[
                pltpu.VMEM((vocab_size, emb_size), emb_table.dtype),
                pltpu.SemaphoreType.DMA(()),
            ],
        ),
        compiler_params=pltpu.CompilerParams(
            # "arbitrary": the one-time table load at program_id == 0 needs a
            # sequential grid (and avoids a duplicate table copy per TC on v7x).
            dimension_semantics=("arbitrary",),
            vmem_limit_bytes=vmem_limit,
        ),
        cost_estimate=pl.CostEstimate(
            flops=n_pad * emb_size,
            transcendentals=0,
            bytes_accessed=table_bytes + n_pad * 4 + n_pad * emb_size * itemsize,
        ),
    )(ids, emb_table)
    return out_flat[:n_tokens]


# ---------------------------------------------------------------------------
# Fallback: table too large for VMEM residency -> manual per-row DMA ring.
# ---------------------------------------------------------------------------
_GATHER_DEPTH = 8   # in-flight row DMAs in the gather ring


def _token_embedding_hbm_gather(ids: jax.Array, emb_table: jax.Array,
                                *, block_tokens: int) -> jax.Array:
    vocab_size, emb_size = emb_table.shape
    out_dtype = emb_table.dtype
    itemsize = emb_table.dtype.itemsize
    scale = float(math.sqrt(emb_size))
    n_tokens = ids.shape[0]

    t_blk = min(block_tokens, _round_up(n_tokens, 8))
    t_blk = max(_GATHER_DEPTH, _round_up(t_blk, 8))
    n_pad = _round_up(n_tokens, t_blk)
    if n_pad != n_tokens:
        ids = jnp.pad(ids, (0, n_pad - n_tokens))
    n_blocks = n_pad // t_blk

    def kernel(ids_ref, tbl_hbm, out_ref, rowbuf, sems):
        base = pl.program_id(0) * t_blk

        def start_fetch(tok, slot):
            idx = ids_ref[base + tok]
            pltpu.make_async_copy(tbl_hbm.at[pl.ds(idx, 1), :],
                                  rowbuf.at[pl.ds(slot, 1), :],
                                  sems.at[slot]).start()

        # Prime the ring with the first DEPTH row fetches.
        for t in range(_GATHER_DEPTH):
            start_fetch(t, t)

        def body(t, carry):
            slot = t & (_GATHER_DEPTH - 1)
            pltpu.make_async_copy(tbl_hbm.at[pl.ds(0, 1), :],
                                  rowbuf.at[pl.ds(slot, 1), :],
                                  sems.at[slot]).wait()
            row = rowbuf[pl.ds(slot, 1), :]
            out_ref[pl.ds(t, 1), :] = (
                row.astype(jnp.float32) * scale).astype(out_ref.dtype)

            @pl.when(t + _GATHER_DEPTH < t_blk)
            def _():
                start_fetch(t + _GATHER_DEPTH, slot)
            return carry

        jax.lax.fori_loop(0, t_blk, body, 0)

    out_tile_bytes = t_blk * emb_size * itemsize
    vmem_limit = int(min(_usable_vmem_bytes(),
                         2 * out_tile_bytes
                         + _GATHER_DEPTH * emb_size * itemsize + (6 << 20)))

    out_flat = pl.pallas_call(
        kernel,
        out_shape=jax.ShapeDtypeStruct((n_pad, emb_size), out_dtype),
        grid_spec=pltpu.PrefetchScalarGridSpec(
            num_scalar_prefetch=1,
            grid=(n_blocks,),
            in_specs=[pl.BlockSpec(memory_space=pl.ANY)],   # table stays in HBM
            out_specs=pl.BlockSpec((t_blk, emb_size), lambda i, ids_ref: (i, 0)),
            scratch_shapes=[
                pltpu.VMEM((_GATHER_DEPTH, emb_size), emb_table.dtype),
                pltpu.SemaphoreType.DMA((_GATHER_DEPTH,)),
            ],
        ),
        compiler_params=pltpu.CompilerParams(
            dimension_semantics=("parallel",),   # each step waits all its DMAs
            vmem_limit_bytes=vmem_limit,
        ),
        cost_estimate=pl.CostEstimate(
            flops=n_pad * emb_size,
            transcendentals=0,
            bytes_accessed=n_pad * 4 + 2 * n_pad * emb_size * itemsize,
        ),
    )(ids, emb_table)
    return out_flat[:n_tokens]


# ---------------------------------------------------------------------------
# Public wrapper.
# ---------------------------------------------------------------------------
def token_embedding(tokens: jax.Array, emb_table: jax.Array,
                    *, block_tokens: int = 256) -> jax.Array:
    """Pallas implementation of nn.Embedding(tokens.long()) * sqrt(emb_size)."""
    vocab_size, emb_size = emb_table.shape
    tok_shape = tokens.shape

    ids = tokens.reshape(-1).astype(jnp.int32)
    # torch.nn.Embedding raises on out-of-range ids; OOB reads are unchecked on
    # TPU, so clamp defensively to keep every gather in bounds.
    ids = jnp.clip(ids, 0, vocab_size - 1)
    # Note: ids are scalar-prefetched into SMEM; for very long sequences
    # (>~128K tokens) chunk the call to stay inside the SMEM budget.

    table_bytes = vocab_size * emb_size * emb_table.dtype.itemsize
    out_tile_bytes = block_tokens * emb_size * emb_table.dtype.itemsize
    # Single-buffered table + double-buffered output tiles + headroom must fit
    # in usable VMEM (v5e/v6e: 128 MiB, v7x: 64 MiB per TensorCore).
    table_budget = _usable_vmem_bytes() - 2 * out_tile_bytes - (6 << 20)

    if table_bytes <= table_budget:
        out_flat = _token_embedding_vmem_resident(ids, emb_table,
                                                  block_tokens=block_tokens)
    else:
        out_flat = _token_embedding_hbm_gather(ids, emb_table,
                                               block_tokens=block_tokens)
    return out_flat.reshape(*tok_shape, emb_size)


if __name__ == "__main__":
    vocab_size = 64
    emb_size = 128
    seq_len = 8
    batch = 2

    key = jax.random.PRNGKey(0)
    k_emb, k_tok = jax.random.split(key)

    # Deterministic synthetic parameters (matches nn.Embedding(vocab, emb) shape).
    emb_table = jax.random.normal(k_emb, (vocab_size, emb_size), dtype=jnp.float32)
    tokens = jax.random.randint(k_tok, (seq_len, batch), 0, vocab_size, dtype=jnp.int32)

    out = token_embedding(tokens, emb_table)
    out = jax.block_until_ready(out)

    # Reference check (plain JAX gather).
    ref = emb_table[tokens] * jnp.float32(math.sqrt(emb_size))
    assert out.shape == (seq_len, batch, emb_size)
    assert out.dtype == emb_table.dtype
    assert jnp.allclose(out, ref, atol=1e-5, rtol=1e-5)

    print("KERNEL_OK")
</pallas_src>

<mosaic_0001>
module attributes {stable_mosaic.version = 11 : i64} {
  func.func @kernel(%arg0: i32, %arg1: memref<16xi32, #tpu.memory_space<smem>>, %arg2: memref<64x128xf32, #tpu.memory_space<any>>, %arg3: memref<16x128xf32, #tpu.memory_space<vmem>>, %arg4: memref<64x128xf32, #tpu.memory_space<vmem>>, %arg5: memref<!tpu.dma_semaphore, #tpu.memory_space<semaphore_mem>>) attributes {dimension_semantics = [#tpu.dimension_semantics<arbitrary>], iteration_bounds = array<i64: 1>, scalar_prefetch = 1 : i64, scratch_operands = 2 : i64, tpu.core_type = #tpu.core_type<tc>, window_params = [{}, {transform_indices = @transform_1, window_bounds = array<i64: 16, 128>}]} {
    %c0_i32 = arith.constant 0 : i32
    %0 = arith.cmpi eq, %arg0, %c0_i32 : i32
    %1 = arith.extui %0 : i1 to i32
    %c0_i32_0 = arith.constant 0 : i32
    %2 = arith.cmpi ne, %1, %c0_i32_0 : i32
    scf.if %2 {
      tpu.enqueue_dma source(%arg2 : memref<64x128xf32, #tpu.memory_space<any>>) target(%arg4 : memref<64x128xf32, #tpu.memory_space<vmem>>) target_semaphore(%arg5 : memref<!tpu.dma_semaphore, #tpu.memory_space<semaphore_mem>>)
      tpu.wait_dma2 semaphore(%arg5 : memref<!tpu.dma_semaphore, #tpu.memory_space<semaphore_mem>>) src(%arg2 : memref<64x128xf32, #tpu.memory_space<any>>) dst(%arg4 : memref<64x128xf32, #tpu.memory_space<vmem>>)
    } else {
    }
    %c16_i32 = arith.constant 16 : i32
    %3 = arith.muli %arg0, %c16_i32 : i32
    %c0_i32_1 = arith.constant 0 : i32
    %c2_i32 = arith.constant 2 : i32
    %4 = arith.addi %c0_i32_1, %c2_i32 : i32
    %c1_i32 = arith.constant 1 : i32
    scf.for %arg6 = %c0_i32_1 to %4 step %c1_i32  : i32 {
      %c8_i32 = arith.constant 8 : i32
      %5 = arith.muli %arg6, %c8_i32 : i32
      %6 = arith.addi %3, %5 : i32
      %c0_i32_3 = arith.constant 0 : i32
      %7 = arith.addi %6, %c0_i32_3 : i32
      %8 = arith.index_cast %7 : i32 to index
      %9 = memref.load %arg1[%8] : memref<16xi32, #tpu.memory_space<smem>>
      %10 = arith.index_cast %9 : i32 to index
      %c0 = arith.constant 0 : index
      %11 = vector.load %arg4[%10, %c0] : memref<64x128xf32, #tpu.memory_space<vmem>>, vector<1x128xf32>
      %c1_i32_4 = arith.constant 1 : i32
      %12 = arith.addi %6, %c1_i32_4 : i32
      %13 = arith.index_cast %12 : i32 to index
      %14 = memref.load %arg1[%13] : memref<16xi32, #tpu.memory_space<smem>>
      %15 = arith.index_cast %14 : i32 to index
      %c0_5 = arith.constant 0 : index
      %16 = vector.load %arg4[%15, %c0_5] : memref<64x128xf32, #tpu.memory_space<vmem>>, vector<1x128xf32>
      %c2_i32_6 = arith.constant 2 : i32
      %17 = arith.addi %6, %c2_i32_6 : i32
      %18 = arith.index_cast %17 : i32 to index
      %19 = memref.load %arg1[%18] : memref<16xi32, #tpu.memory_space<smem>>
      %20 = arith.index_cast %19 : i32 to index
      %c0_7 = arith.constant 0 : index
      %21 = vector.load %arg4[%20, %c0_7] : memref<64x128xf32, #tpu.memory_space<vmem>>, vector<1x128xf32>
      %c3_i32 = arith.constant 3 : i32
      %22 = arith.addi %6, %c3_i32 : i32
      %23 = arith.index_cast %22 : i32 to index
      %24 = memref.load %arg1[%23] : memref<16xi32, #tpu.memory_space<smem>>
      %25 = arith.index_cast %24 : i32 to index
      %c0_8 = arith.constant 0 : index
      %26 = vector.load %arg4[%25, %c0_8] : memref<64x128xf32, #tpu.memory_space<vmem>>, vector<1x128xf32>
      %c4_i32 = arith.constant 4 : i32
      %27 = arith.addi %6, %c4_i32 : i32
      %28 = arith.index_cast %27 : i32 to index
      %29 = memref.load %arg1[%28] : memref<16xi32, #tpu.memory_space<smem>>
      %30 = arith.index_cast %29 : i32 to index
      %c0_9 = arith.constant 0 : index
      %31 = vector.load %arg4[%30, %c0_9] : memref<64x128xf32, #tpu.memory_space<vmem>>, vector<1x128xf32>
      %c5_i32 = arith.constant 5 : i32
      %32 = arith.addi %6, %c5_i32 : i32
      %33 = arith.index_cast %32 : i32 to index
      %34 = memref.load %arg1[%33] : memref<16xi32, #tpu.memory_space<smem>>
      %35 = arith.index_cast %34 : i32 to index
      %c0_10 = arith.constant 0 : index
      %36 = vector.load %arg4[%35, %c0_10] : memref<64x128xf32, #tpu.memory_space<vmem>>, vector<1x128xf32>
      %c6_i32 = arith.constant 6 : i32
      %37 = arith.addi %6, %c6_i32 : i32
      %38 = arith.index_cast %37 : i32 to index
      %39 = memref.load %arg1[%38] : memref<16xi32, #tpu.memory_space<smem>>
      %40 = arith.index_cast %39 : i32 to index
      %c0_11 = arith.constant 0 : index
      %41 = vector.load %arg4[%40, %c0_11] : memref<64x128xf32, #tpu.memory_space<vmem>>, vector<1x128xf32>
      %c7_i32 = arith.constant 7 : i32
      %42 = arith.addi %6, %c7_i32 : i32
      %43 = arith.index_cast %42 : i32 to index
      %44 = memref.load %arg1[%43] : memref<16xi32, #tpu.memory_space<smem>>
      %45 = arith.index_cast %44 : i32 to index
      %c0_12 = arith.constant 0 : index
      %46 = vector.load %arg4[%45, %c0_12] : memref<64x128xf32, #tpu.memory_space<vmem>>, vector<1x128xf32>
      %47 = tpu.concatenate %11, %16, %21, %26, %31, %36, %41, %46 in 0 : vector<1x128xf32>, vector<1x128xf32>, vector<1x128xf32>, vector<1x128xf32>, vector<1x128xf32>, vector<1x128xf32>, vector<1x128xf32>, vector<1x128xf32> -> vector<8x128xf32>
      %c8_i32_13 = arith.constant 8 : i32
      %48 = arith.muli %arg6, %c8_i32_13 : i32
      %49 = tpu.assume_multiple %48, 8 : i32
      %cst = arith.constant 11.3137083 : f32
      %50 = vector.broadcast %cst : f32 to vector<8x128xf32>
      %51 = arith.mulf %47, %50 : vector<8x128xf32>
      %52 = arith.index_cast %49 : i32 to index
      %c0_14 = arith.constant 0 : index
      %53 = vector.load %arg3[%52, %c0_14] : memref<16x128xf32, #tpu.memory_space<vmem>>, vector<8x128xf32>
      tpu.vector_store %arg3[%52, %c0_14], %51 {strides = array<i32>} : memref<16x128xf32, #tpu.memory_space<vmem>>, vector<8x128xf32>,
    }
    %c2_i32_2 = arith.constant 2 : i32
    return
  }
  func.func @transform_1(%arg0: i32, %arg1: memref<16xi32, #tpu.memory_space<smem>>) -> (i32, i32) {
    %c0_i32 = arith.constant 0 : i32
    %c0_i32_0 = arith.constant 0 : i32
    return %arg0, %c0_i32 : i32, i32
  }
}

</mosaic_0001>

<llo_original>
// kernel: tpu_custom_call.1
$region0: #{tpu_custom_call.1}
  #allocation0 [shape = 'u32[]', space=smem, size = 0x4, offset = 0x4, fixed_abs, tag = 'smem constant byte address 0x4 - core index']
  #allocation1 [shape = 'u32[144,128]{1,0:T(1,128)}', space=vmem, size = 0x12000, scoped, tag = 'internal scratch']
  #allocation2 [shape = 'f32[64,128]{1,0:T(8,128)}', space=vmem, size = 0x8000, scoped, tag = 'scratch operand']
  #allocation3 [shape = 's32[1]{0}', space=sflag, size = 0x4, scoped, tag = 'scratch operand']
  #allocation4 [shape = 's32[1]{0}', space=sflag, size = 0x4, scoped, tag = 'scoped memory for tpu_custom_call.1']
  #allocation5 [shape = 'u8[512]{0}', space=smem, size = 0x200, scoped, tag = 'prefetched SMEM operand 0']
  #allocation8 [shape = 's32[]', space=sflag, size = 0x4, offset = 0, fixed_abs, tag = 'sflag constant byte address 0x0 - dummy sync flag']
  #allocation9 [shape = 's32[]', space=sflag, size = 0x4, offset = 0, fixed_abs, tag = 'sflag constant byte address 0x0 - dummy sync flag']
  #allocation10 [shape = 'u32[]', space=smem, size = 0x4, offset = 0x44, fixed_abs, tag = 'smem constant byte address 0x44 - assertion arg 0']
  #allocation11 [shape = 'u32[]', space=smem, size = 0x4, offset = 0x48, fixed_abs, tag = 'smem constant byte address 0x48 - assertion arg 1']
  %s0 = inlined_call_operand.hbm [shape: s32[16], index: 0, kind: input, shape index: {}]
  %s1 = inlined_call_operand.hbm [shape: f32[64,128], index: 1, kind: input, shape index: {}]
  %s2 = inlined_call_operand.hbm [shape: f32[16,128], index: 2, kind: output, shape index: {}]
  %s3 = sld [smem:[#allocation0]]
  $region25: #{tpu_custom_call.1} parent=0
    _
  %s5 = ssub.s32 1, %s3
  %s6 = scalar_select 0, %s5, %s3
  %8 = dma.hbm_to_smem %s0, 16, [#allocation5], [#allocation4]
  %9 = dma.done [#allocation4], 16
  %10 = sfence
  $region1: #{tpu_custom_call.1} parent=0
    #allocation6 [shape = 'u8[8192]{0}', space=vmem, size = 0x2000, scoped, tag = 'output window, operand 0, single buffered']
    #allocation7 [shape = 's32[1]{0}', space=sflag, size = 0x4, scoped, tag = 'scoped memory for tpu_custom_call.1']
    %11 = vsyncpa [#allocation7], 0
    %p12 = scmp.eq.s32.totalorder 0, 0
    // Predicated region
    $region2: #{tpu_custom_call.1} parent=1 // pred_check
      %p13 = pneg %p12
    $region3: #{tpu_custom_call.1} parent=1 // pred_check_branch
      %15 = sbr.rel (%p13) target = $region5
    $region4: #{tpu_custom_call.1} parent=1 // pred_region
      // Predicated region
      $region6: #{tpu_custom_call.1} parent=4 // pred_check
        _
      $region7: #{tpu_custom_call.1} parent=4 // pred_check_branch
        %17 = sbr.rel target = $region9
      $region8: #{tpu_custom_call.1} parent=4 // pred_region
        %18 = sst [smem:[#allocation10]] [#allocation9]
        %19 = sst [smem:[#allocation11]] [#allocation8]
      $region9: #{tpu_custom_call.1} parent=4 // pred_fallthru
        _
      %21 = shalt.err (0)
      %s23 = sshll.u32 [#allocation2], 4
      %s24 = int_to_ptr.vmem [resolvable:$true] %s23
      %26 = dma.hbm_to_vmem [thread:$0]  %s1, 1024, %s24, [#allocation3]
      %s27 = smul.u32 64, 1
      %s28 = sshll.u32 %s27, 4
      %29 = dma.done [#allocation3], %s28
    $region5: #{tpu_custom_call.1} parent=1 // pred_fallthru
      _
    %s30 = smul.u32 0, 16
    loop: start=0, step=1, limit=2
    $region10: #{tpu_custom_call.1} parent=1 // loop_pre_header
      _
    $region11: #{tpu_custom_call.1} parent=1 // loop_header
      %s32 = sphi 0, %s36
      %p33 = scmp.ge.s32.totalorder %s32, 2
    $region12: #{tpu_custom_call.1} parent=1 // loop_header_branch
      %35 = sbr.rel (%p33) target = $region16
    $region13: #{tpu_custom_call.1} parent=1 // loop_body
      %s37 = smul.u32 %s32, 8
      %s38 = sadd.s32 %s30, %s37
      %s39 = sld [smem:[#allocation5 + %s38]]
      %s40 = scalar_lea.vmem [#allocation2], %s39
      %v41 = vld [vmem:[%s40] sm:$0x1]
      %s42 = sadd.s32 %s38, 1
      %s43 = sld [smem:[#allocation5 + %s42]]
      %s44 = scalar_lea.vmem [#allocation2], %s43
      %v45 = vld [vmem:[%s44] sm:$0x1]
      %s46 = sadd.s32 %s38, 2
      %s47 = sld [smem:[#allocation5 + %s46]]
      %s48 = scalar_lea.vmem [#allocation2], %s47
      %v49 = vld [vmem:[%s48] sm:$0x1]
      %s50 = sadd.s32 %s38, 3
      %s51 = sld [smem:[#allocation5 + %s50]]
      %s52 = scalar_lea.vmem [#allocation2], %s51
      %v53 = vld [vmem:[%s52] sm:$0x1]
      %s54 = sadd.s32 %s38, 4
      %s55 = sld [smem:[#allocation5 + %s54]]
      %s56 = scalar_lea.vmem [#allocation2], %s55
      %v57 = vld [vmem:[%s56] sm:$0x1]
      %s58 = sadd.s32 %s38, 5
      %s59 = sld [smem:[#allocation5 + %s58]]
      %s60 = scalar_lea.vmem [#allocation2], %s59
      %v61 = vld [vmem:[%s60] sm:$0x1]
      %s62 = sadd.s32 %s38, 6
      %s63 = sld [smem:[#allocation5 + %s62]]
      %s64 = scalar_lea.vmem [#allocation2], %s63
      %v65 = vld [vmem:[%s64] sm:$0x1]
      %s66 = sadd.s32 %s38, 7
      %s67 = sld [smem:[#allocation5 + %s66]]
      %s68 = scalar_lea.vmem [#allocation2], %s67
      %v69 = vld [vmem:[%s68] sm:$0x1]
      %v71 = vrot.slane %v45, 7
      %v74 = vrot.slane %v49, 6
      %v77 = vrot.slane %v53, 5
      %v80 = vrot.slane %v57, 4
      %v83 = vrot.slane %v61, 3
      %v86 = vrot.slane %v65, 2
      %v89 = vrot.slane %v69, 1
      %vm91 = vcmask 1040384
      %v92 = vsel %vm91, %v41, %v71
      %vm93 = vcmask 1041408
      %v94 = vsel %vm93, %v92, %v74
      %vm95 = vcmask 1042432
      %v96 = vsel %vm95, %v94, %v77
      %vm97 = vcmask 1043456
      %v98 = vsel %vm97, %v96, %v80
      %vm99 = vcmask 1044480
      %v100 = vsel %vm99, %v98, %v83
      %vm101 = vcmask 1045504
      %v102 = vsel %vm101, %v100, %v86
      %vm103 = vcmask 1046528
      %v104 = vsel %vm103, %v102, %v89
      %v105 = vmul.f32 %v104, 11.313708
      %s106 = scalar_lea.vmem [#allocation6], %s37
      %107 = vst [vmem:[%s106] sm:$0xff] %v105
    $region14: #{tpu_custom_call.1} parent=1 // loop_footer
      %s36 = sadd.s32 1, %s32
    $region15: #{tpu_custom_call.1} parent=1 // loop_footer_branch
      %31 = sbr.rel target = $region11
    $region16: #{tpu_custom_call.1} parent=1 // loop_exit
      _
    // Predicated region
    $region17: #{tpu_custom_call.1} parent=1 // pred_check
      _
    $region18: #{tpu_custom_call.1} parent=1 // pred_check_branch
      %109 = sbr.rel (0) target = $region20
    $region19: #{tpu_custom_call.1} parent=1 // pred_region
      %s111 = ssub.s32 256, 256
      %112 = vsyncadd [#allocation7], %s111
      %s113 = sshll.u32 [#allocation6], 4
      %s114 = int_to_ptr.vmem [resolvable:$true] %s113
      %119 = dma.vmem_to_hbm [thread:$0]  %s114, 256, %s2, [#allocation7], 128, 128, 8
    $region20: #{tpu_custom_call.1} parent=1 // pred_fallthru
      _
    // Predicated region
    $region21: #{tpu_custom_call.1} parent=1 // pred_check
      _
    $region22: #{tpu_custom_call.1} parent=1 // pred_check_branch
      %121 = sbr.rel (0) target = $region24
    $region23: #{tpu_custom_call.1} parent=1 // pred_region
      %122 = dma.done [#allocation7], 256
    $region24: #{tpu_custom_call.1} parent=1 // pred_fallthru
      _
    %123 = vsyncpa [#allocation7], 1
  %124 = vsyncmov [#allocation3]
  %s125 = vpop.sfrf %124
  %p126 = scmp.eq.s32.totalorder %s125, 0
  %p127 = pneg %p126
  %129 = shalt.err (%p127)

</llo_original>
